<compile_context>
chip_gen: v7x
topology: tpu7x:2x2x1
jax: 0.10.0
libtpu: 0.0.40
codegen_flags: <defaults>
</compile_context>

<pallas_src>
import jax
import jax.numpy as jnp
from jax.experimental import pallas as pl
from jax.experimental.pallas import tpu as pltpu


def _normalization_kernel(scale_ref, bias_ref, img_ref, out_ref):
    # scale_ref / bias_ref: (row_tile, 1) float32 VMEM, broadcast over lanes.
    # img_ref / out_ref:    (row_tile, col_tile) VMEM tile.
    # Mixed-precision FMA: low-precision img promotes to f32 against the f32
    # scale/bias, then a single cast back to the output dtype.
    x = img_ref[...]
    out_ref[...] = (x * scale_ref[...] + bias_ref[...]).astype(out_ref.dtype)


def _round_up(x, m):
    return ((x + m - 1) // m) * m


def _sublane(itemsize):
    # f32 -> 8, bf16/f16 -> 16, int8/fp8 -> 32
    return max(8, 32 // itemsize)


def _largest_col_tile(cols, max_elems):
    """Largest multiple of 128 dividing `cols` and <= max_elems.

    `cols` is guaranteed to be a multiple of 128 (wrapper pads), so 128 always
    divides.  Prefer a tile giving an even number of column steps (v7x has two
    TensorCores) as long as it stays within 2x of the largest candidate.
    """
    cands = [t for t in range(128, min(cols, max_elems) + 1, 128) if cols % t == 0]
    if not cands:
        return 128
    best = cands[-1]
    for t in reversed(cands):
        if (cols // t) % 2 == 0 and t * 2 >= best:
            return t
    return best


def _pick_tiles(rows, cols, itemsize, sublane, target_bytes):
    """Pick (row_tile, col_tile) dividing (rows, cols) with tile <= target."""
    if rows * cols * itemsize <= target_bytes:
        return rows, cols  # whole slab in a single block / single grid step
    if rows * 128 * itemsize <= target_bytes:
        row_tile = rows
    else:
        # Very tall slab: tile rows as well (multiple of `sublane` dividing rows).
        row_tile = max(sublane, (target_bytes // (128 * itemsize)) // sublane * sublane)
        row_tile = min(row_tile, rows)
        while rows % row_tile != 0:
            row_tile -= sublane
    max_col = max(128, (target_bytes // (row_tile * itemsize)) // 128 * 128)
    col_tile = _largest_col_tile(cols, max_col)
    return row_tile, col_tile


# 4-8 MiB is the measured sweet spot; keep <= ~7 MiB so double-buffered
# in+out tiles stay well under v7x's 64 MiB physical VMEM per TensorCore.
_TARGET_TILE_BYTES = 6 << 20


def normalization(img, mean, std):
    """img: (N, C, H, W); mean/std: (C,) per-channel scalars."""
    N, C, H, W = img.shape
    HW = H * W
    dtype = img.dtype
    itemsize = jnp.dtype(dtype).itemsize
    sublane = _sublane(itemsize)

    # Per-(n, c)-row parameters in float32 (avoid double rounding for bf16):
    #   out = img * (1/std) + (-mean/std)
    # TODO(synk): std == 0 produces inf/nan, same as the PyTorch reference.
    mean_f32 = jnp.asarray(mean, dtype=jnp.float32).reshape(C)
    std_f32 = jnp.asarray(std, dtype=jnp.float32).reshape(C)
    scale = jnp.tile(1.0 / std_f32, N).reshape(N * C, 1)          # row = n*C + c
    bias = jnp.tile(-mean_f32 / std_f32, N).reshape(N * C, 1)

    # 2-D lane/sublane-dense view: rows = N*C (channel folded into sublanes),
    # cols = H*W.  Pad to hardware tile multiples (cheap XLA pad, only for
    # awkward shapes; typical image sizes need no padding).
    rows, cols = N * C, HW
    rows_pad = _round_up(rows, sublane)
    cols_pad = _round_up(cols, 128)
    x = img.reshape(rows, cols)
    if (rows_pad, cols_pad) != (rows, cols):
        x = jnp.pad(x, ((0, rows_pad - rows), (0, cols_pad - cols)))
        scale = jnp.pad(scale, ((0, rows_pad - rows), (0, 0)))     # 0*x + 0 = 0
        bias = jnp.pad(bias, ((0, rows_pad - rows), (0, 0)))

    row_tile, col_tile = _pick_tiles(rows_pad, cols_pad, itemsize, sublane,
                                     _TARGET_TILE_BYTES)
    grid = (rows_pad // row_tile, cols_pad // col_tile)

    # Double-buffered in+out tiles + tiny scale/bias blocks + slack.
    tile_bytes = row_tile * col_tile * itemsize
    vmem_limit = max(4 * tile_bytes + 8 * row_tile * 4 + (1 << 20), 8 << 20)

    out = pl.pallas_call(
        _normalization_kernel,
        out_shape=jax.ShapeDtypeStruct((rows_pad, cols_pad), dtype),
        grid=grid,
        in_specs=[
            pl.BlockSpec((row_tile, 1), lambda r, t: (r, 0)),          # scale
            pl.BlockSpec((row_tile, 1), lambda r, t: (r, 0)),          # bias
            pl.BlockSpec((row_tile, col_tile), lambda r, t: (r, t)),   # img
        ],
        out_specs=pl.BlockSpec((row_tile, col_tile), lambda r, t: (r, t)),
        compiler_params=pltpu.CompilerParams(
            dimension_semantics=("parallel", "parallel"),
            vmem_limit_bytes=int(vmem_limit),
        ),
        cost_estimate=pl.CostEstimate(
            flops=2 * rows_pad * cols_pad,
            transcendentals=0,
            bytes_accessed=2 * rows_pad * cols_pad * itemsize + 2 * rows_pad * 4,
        ),
        # NOTE: if the caller no longer needs `img`, input_output_aliases={2: 0}
        # would remove one HBM allocation; left off to keep the input intact.
    )(scale, bias, x)

    return out[:rows, :cols].reshape(N, C, H, W)


if __name__ == "__main__":
    key = jax.random.PRNGKey(0)
    N, C, H, W = 2, 4, 16, 16

    img = jax.random.normal(key, (N, C, H, W), dtype=jnp.float32)
    # Deterministic "checkpoint-free" parameters (module __init__ takes mean/std lists).
    mean = jnp.array([0.485, 0.456, 0.406, 0.5], dtype=jnp.float32)
    std = jnp.array([0.229, 0.224, 0.225, 0.25], dtype=jnp.float32)

    out = normalization(img, mean, std)
    out = jax.block_until_ready(out)

    # Reference check (pure JAX, mirrors PyTorch broadcasting of (C,1,1)).
    # x*(1/s) + (-m/s) differs from (x-m)/s by ~1 ulp, hence the tolerance.
    ref = (img - mean.reshape(1, C, 1, 1)) / std.reshape(1, C, 1, 1)
    assert out.shape == (N, C, H, W)
    assert jnp.allclose(out, ref, atol=1e-5, rtol=1e-5), "mismatch vs reference"

    print("KERNEL_OK")
</pallas_src>

<mosaic_0001>
module attributes {stable_mosaic.version = 11 : i64} {
  func.func @_normalization_kernel(%arg0: i32, %arg1: i32, %arg2: memref<8x1xf32, #tpu.memory_space<vmem>>, %arg3: memref<8x1xf32, #tpu.memory_space<vmem>>, %arg4: memref<8x256xf32, #tpu.memory_space<vmem>>, %arg5: memref<8x256xf32, #tpu.memory_space<vmem>>) attributes {dimension_semantics = [#tpu.dimension_semantics<parallel>, #tpu.dimension_semantics<parallel>], iteration_bounds = array<i64: 1, 1>, scalar_prefetch = 0 : i64, scratch_operands = 0 : i64, tpu.core_type = #tpu.core_type<tc>, window_params = [{transform_indices = @transform_0, window_bounds = array<i64: 8, 1>}, {transform_indices = @transform_1, window_bounds = array<i64: 8, 1>}, {transform_indices = @transform_2, window_bounds = array<i64: 8, 256>}, {transform_indices = @transform_3, window_bounds = array<i64: 8, 256>}]} {
    %c0 = arith.constant 0 : index
    %c0_0 = arith.constant 0 : index
    %0 = vector.load %arg4[%c0, %c0_0] : memref<8x256xf32, #tpu.memory_space<vmem>>, vector<8x256xf32>
    %c0_1 = arith.constant 0 : index
    %c0_2 = arith.constant 0 : index
    %1 = vector.load %arg2[%c0_1, %c0_2] : memref<8x1xf32, #tpu.memory_space<vmem>>, vector<8x1xf32>
    %2 = vector.broadcast %1 : vector<8x1xf32> to vector<8x256xf32>
    %3 = arith.mulf %0, %2 : vector<8x256xf32>
    %c0_3 = arith.constant 0 : index
    %c0_4 = arith.constant 0 : index
    %4 = vector.load %arg3[%c0_3, %c0_4] : memref<8x1xf32, #tpu.memory_space<vmem>>, vector<8x1xf32>
    %5 = vector.broadcast %4 : vector<8x1xf32> to vector<8x256xf32>
    %6 = arith.addf %3, %5 : vector<8x256xf32>
    %c0_5 = arith.constant 0 : index
    %c0_6 = arith.constant 0 : index
    %7 = vector.load %arg5[%c0_5, %c0_6] : memref<8x256xf32, #tpu.memory_space<vmem>>, vector<8x256xf32>
    tpu.vector_store %arg5[%c0_5, %c0_6], %6 {strides = array<i32>} : memref<8x256xf32, #tpu.memory_space<vmem>>, vector<8x256xf32>,
    return
  }
  func.func @transform_0(%arg0: i32, %arg1: i32) -> (i32, i32) {
    %c0_i32 = arith.constant 0 : i32
    %c0_i32_0 = arith.constant 0 : i32
    return %arg0, %c0_i32 : i32, i32
  }
  func.func @transform_1(%arg0: i32, %arg1: i32) -> (i32, i32) {
    %c0_i32 = arith.constant 0 : i32
    %c0_i32_0 = arith.constant 0 : i32
    return %arg0, %c0_i32 : i32, i32
  }
  func.func @transform_2(%arg0: i32, %arg1: i32) -> (i32, i32) {
    %c0_i32 = arith.constant 0 : i32
    return %arg0, %arg1 : i32, i32
  }
  func.func @transform_3(%arg0: i32, %arg1: i32) -> (i32, i32) {
    %c0_i32 = arith.constant 0 : i32
    return %arg0, %arg1 : i32, i32
  }
}

</mosaic_0001>

<llo_original>
// kernel: tpu_custom_call.1
$region0: #{tpu_custom_call.1}
  #allocation0 [shape = 'u32[]', space=smem, size = 0x4, offset = 0x4, fixed_abs, tag = 'smem constant byte address 0x4 - core index']
  #allocation1 [shape = 'u32[144,128]{1,0:T(1,128)}', space=vmem, size = 0x12000, scoped, tag = 'internal scratch']
  %s0 = inlined_call_operand.vmem [shape: f32[8,1], index: 0, kind: input, shape index: {}]
  %s1 = inlined_call_operand.vmem [shape: f32[8,1], index: 1, kind: input, shape index: {}]
  %s2 = inlined_call_operand.vmem [shape: f32[8,256], index: 2, kind: input, shape index: {}]
  %s3 = inlined_call_operand.hbm [shape: f32[8,256], index: 3, kind: output, shape index: {}]
  %s4 = sld [smem:[#allocation0]]
  $region22: #{tpu_custom_call.1} parent=0
    _
  %s6 = ssub.s32 1, %s4
  %s7 = scalar_select 0, %s6, %s4
  $region1: #{tpu_custom_call.1} parent=0
    #allocation2 [shape = 'u8[8192]{0}', space=vmem, size = 0x2000, scoped, tag = 'output window, operand 0, single buffered']
    #allocation3 [shape = 's32[1]{0}', space=sflag, size = 0x4, scoped, tag = 'scoped memory for tpu_custom_call.1']
    %8 = vsyncpa [#allocation3], 0
    // Predicated region
    $region2: #{tpu_custom_call.1} parent=1 // pred_check
      _
    $region3: #{tpu_custom_call.1} parent=1 // pred_check_branch
      %10 = sbr.rel (0) target = $region5
    $region4: #{tpu_custom_call.1} parent=1 // pred_region
      _
    $region5: #{tpu_custom_call.1} parent=1 // pred_fallthru
      _
    // Predicated region
    $region6: #{tpu_custom_call.1} parent=1 // pred_check
      _
    $region7: #{tpu_custom_call.1} parent=1 // pred_check_branch
      %12 = sbr.rel (0) target = $region9
    $region8: #{tpu_custom_call.1} parent=1 // pred_region
      _
    $region9: #{tpu_custom_call.1} parent=1 // pred_fallthru
      _
    // Predicated region
    $region10: #{tpu_custom_call.1} parent=1 // pred_check
      _
    $region11: #{tpu_custom_call.1} parent=1 // pred_check_branch
      %14 = sbr.rel (0) target = $region13
    $region12: #{tpu_custom_call.1} parent=1 // pred_region
      _
    $region13: #{tpu_custom_call.1} parent=1 // pred_fallthru
      _
    %v15 = vld [vmem:[%s2] sm:$0xff]
    %v16 = vld [vmem:[%s2 + $0x8] sm:$0xff]
    %v17 = vld [vmem:[%s0] sm:$0xff]
    %19 = vset.pattern.permute.xlu0 0
    %20 = vperm.xlu0 %19, %v17
    %v21 = vpop.permute.xlu0 %20
    %v23 = vmul.f32 %v15, %v21
    %v24 = vmul.f32 %v16, %v21
    %v25 = vld [vmem:[%s1] sm:$0xff]
    %27 = vset.pattern.permute.xlu0 0
    %28 = vperm.xlu0 %27, %v25
    %v29 = vpop.permute.xlu0 %28
    %v31 = vadd.f32 %v23, %v29
    %v32 = vadd.f32 %v24, %v29
    %33 = vst [vmem:[#allocation2] sm:$0xff] %v31
    %34 = vst [vmem:[#allocation2 + $0x8] sm:$0xff] %v32
    // Predicated region
    $region14: #{tpu_custom_call.1} parent=1 // pred_check
      _
    $region15: #{tpu_custom_call.1} parent=1 // pred_check_branch
      %36 = sbr.rel (0) target = $region17
    $region16: #{tpu_custom_call.1} parent=1 // pred_region
      %s38 = ssub.s32 256, 256
      %39 = vsyncadd [#allocation3], %s38
      %s41 = sshll.u32 [#allocation2], 4
      %s42 = int_to_ptr.vmem [resolvable:$true] %s41
      %44 = dma.vmem_to_hbm [thread:$0]  %s42, 256, %s3, [#allocation3]
    $region17: #{tpu_custom_call.1} parent=1 // pred_fallthru
      _
    // Predicated region
    $region18: #{tpu_custom_call.1} parent=1 // pred_check
      _
    $region19: #{tpu_custom_call.1} parent=1 // pred_check_branch
      %46 = sbr.rel (0) target = $region21
    $region20: #{tpu_custom_call.1} parent=1 // pred_region
      %47 = dma.done [#allocation3], 256
    $region21: #{tpu_custom_call.1} parent=1 // pred_fallthru
      _
    %48 = vsyncpa [#allocation3], 1

</llo_original>
